<compile_context>
chip_gen: v5e
topology: v5e:2x2
jax: 0.10.0
libtpu: 0.0.40
codegen_flags: <defaults>
</compile_context>

<pallas_src>
import functools

import jax
import jax.numpy as jnp
from jax.experimental import pallas as pl
from jax.experimental.pallas import tpu as pltpu

LANE = 128  # lane width / padded feature dims


def _round_up(n, m):
    return pl.cdiv(n, m) * m


def _pad2d(a, rows, cols, dtype):
    out = jnp.zeros((rows, cols), dtype)
    return out.at[: a.shape[0], : a.shape[1]].set(a.astype(dtype))


def mock_decoder_kernel(x_ref, wf_ref, bf_ref, o_ref):
    # x_ref: (TB, HP) f32   wf_ref: (HP, OP) bf16   bf_ref: (1, OP) f32
    # o_ref: (TB, OP) f32
    x = x_ref[...].astype(jnp.bfloat16)            # cast in-kernel (free on VPU)
    y = jnp.dot(x, wf_ref[...], preferred_element_type=jnp.float32) + bf_ref[...]
    o_ref[...] = y.astype(o_ref.dtype)


def prepare_params(w1, b1, w2, b2):
    """One-time transform of torch-layout params into kernel-ready form.

    w1: (H, H), b1: (H,), w2: (O, H), b2: (O,)  (torch Linear layout)

    Folds the two Linears (exact in real arithmetic, f32 HIGHEST-precision fold)
    and pads to lane-dense 128-wide blocks:
      wfp: (HP, OP) bf16,  bfp: (1, OP) f32
    Zero padding keeps the math exact: padded hidden columns have zero weights
    AND zero bias, so they contribute nothing to the first O output columns.
    """
    H = w1.shape[0]
    O = w2.shape[0]
    HP = _round_up(H, LANE)
    OP = _round_up(O, LANE)
    hi = jax.lax.Precision.HIGHEST
    wf = jnp.dot(w1.T, w2.T, precision=hi)         # (H, O) = W1^T @ W2^T
    bf = jnp.dot(b1, w2.T, precision=hi) + b2      # (O,)   = b1 @ W2^T + b2
    wfp = _pad2d(wf, HP, OP, jnp.bfloat16)
    bfp = _pad2d(bf.reshape(1, O), 1, OP, jnp.float32)
    return wfp, bfp, H, O


@functools.partial(jax.jit, static_argnames=("O",))
def mock_decoder(x, wfp, bfp, *, O):
    """x: (B, H) f32. Params from prepare_params. Returns (B, O) f32."""
    B, H = x.shape
    HP, OP = wfp.shape

    # Adaptive batch tile: no 128-row padding waste for tiny B; big tiles (and
    # >=2 grid steps, so both v7x TensorCores engage) for large B.
    if B <= 512:
        TB = _round_up(max(B, 8), 16)   # 16 = bf16 sublane pack
    else:
        TB = 512
    BP = _round_up(B, TB)

    # Single f32 zero-pad (batch rows + lane dim).  No dtype convert here:
    # the bf16 cast happens inside the kernel, avoiding an extra HBM round trip.
    xp = jnp.zeros((BP, HP), x.dtype).at[:B, :H].set(x)

    grid = (BP // TB,)
    # NOTE: cost uses padded dims (scheduler hint only, not roofline math).
    cost = pl.CostEstimate(
        flops=2 * BP * HP * OP,
        transcendentals=0,
        bytes_accessed=(xp.size * 4 + wfp.size * 2 + bfp.size * 4 + BP * OP * 4),
    )

    out = pl.pallas_call(
        mock_decoder_kernel,
        out_shape=jax.ShapeDtypeStruct((BP, OP), jnp.float32),
        grid_spec=pl.GridSpec(
            grid=grid,
            in_specs=[
                pl.BlockSpec((TB, HP), lambda i: (i, 0)),   # x tile per grid step
                pl.BlockSpec((HP, OP), lambda i: (0, 0)),   # fused weight, resident
                pl.BlockSpec((1, OP), lambda i: (0, 0)),    # fused bias, resident
            ],
            out_specs=pl.BlockSpec((TB, OP), lambda i: (i, 0)),
        ),
        compiler_params=pltpu.CompilerParams(
            # Only engages the second v7x TensorCore once grid >= 2 tiles
            # (i.e. B > TB); harmless sequential loop otherwise.
            dimension_semantics=("parallel",),
        ),
        cost_estimate=cost,
    )(xp, wfp, bfp)

    # Callers that can consume the padded (BP, OP) buffer may skip this slice.
    return out[:B, :O]


def init_params(key, hidden_size=50, output_size=10):
    """torch.nn.Linear-style init: U(-1/sqrt(fan_in), 1/sqrt(fan_in))."""
    k1, k2, k3, k4 = jax.random.split(key, 4)
    bound = 1.0 / (hidden_size ** 0.5)
    w1 = jax.random.uniform(k1, (hidden_size, hidden_size), jnp.float32, -bound, bound)
    b1 = jax.random.uniform(k2, (hidden_size,), jnp.float32, -bound, bound)
    w2 = jax.random.uniform(k3, (output_size, hidden_size), jnp.float32, -bound, bound)
    b2 = jax.random.uniform(k4, (output_size,), jnp.float32, -bound, bound)
    return w1, b1, w2, b2


if __name__ == "__main__":
    hidden_size = 50
    output_size = 10
    batch = 8

    key = jax.random.PRNGKey(0)
    kx, kp = jax.random.split(key)
    x = jax.random.normal(kx, (batch, hidden_size), jnp.float32)
    w1, b1, w2, b2 = init_params(kp, hidden_size, output_size)

    # One-time param prep (layer fold + transpose + pad + bf16 cast), outside
    # the hot path.
    wfp, bfp, H, O = prepare_params(w1, b1, w2, b2)

    out = mock_decoder(x, wfp, bfp, O=O)
    out = jax.block_until_ready(out)

    # Reference in f32 (same math as the torch forward), HIGHEST precision dots.
    hi = jax.lax.Precision.HIGHEST
    ref = jnp.dot(jnp.dot(x, w1.T, precision=hi) + b1, w2.T, precision=hi) + b2

    assert out.shape == (batch, output_size)
    # bf16 weights/activations with f32 accumulation: expected max err ~1e-3.
    assert jnp.allclose(out, ref, atol=3e-2, rtol=3e-2), (
        f"max abs err {jnp.max(jnp.abs(out - ref))}")

    print("KERNEL_OK")
</pallas_src>

<mosaic_0001>
module attributes {stable_mosaic.version = 11 : i64} {
  func.func @mock_decoder_kernel(%arg0: i32, %arg1: memref<16x128xf32, #tpu.memory_space<vmem>>, %arg2: memref<128x128xbf16, #tpu.memory_space<vmem>>, %arg3: memref<1x128xf32, #tpu.memory_space<vmem>>, %arg4: memref<16x128xf32, #tpu.memory_space<vmem>>) attributes {dimension_semantics = [#tpu.dimension_semantics<parallel>], iteration_bounds = array<i64: 1>, scalar_prefetch = 0 : i64, scratch_operands = 0 : i64, tpu.core_type = #tpu.core_type<tc>, window_params = [{transform_indices = @transform_0, window_bounds = array<i64: 16, 128>}, {pipeline_mode = #tpu.pipeline_mode<synchronous>, transform_indices = @transform_1, window_bounds = array<i64: 128, 128>}, {pipeline_mode = #tpu.pipeline_mode<synchronous>, transform_indices = @transform_2, window_bounds = array<i64: 1, 128>}, {transform_indices = @transform_3, window_bounds = array<i64: 16, 128>}]} {
    %c0 = arith.constant 0 : index
    %c0_0 = arith.constant 0 : index
    %0 = vector.load %arg1[%c0, %c0_0] : memref<16x128xf32, #tpu.memory_space<vmem>>, vector<16x128xf32>
    %1 = arith.truncf %0 : vector<16x128xf32> to vector<16x128xbf16>
    %c0_1 = arith.constant 0 : index
    %c0_2 = arith.constant 0 : index
    %2 = vector.load %arg2[%c0_1, %c0_2] : memref<128x128xbf16, #tpu.memory_space<vmem>>, vector<128x128xbf16>
    %cst = arith.constant dense<0.000000e+00> : vector<16x128xf32>
    %3 = tpu.matmul %1, %2, %cst {dimension_numbers = #tpu.dot_dimension_numbers<[1], [0], [0], [1], [0, 0, 1, 1], [], []>} : vector<16x128xbf16>, vector<128x128xbf16>, vector<16x128xf32> -> vector<16x128xf32>
    %c0_3 = arith.constant 0 : index
    %c0_4 = arith.constant 0 : index
    %4 = vector.load %arg3[%c0_3, %c0_4] : memref<1x128xf32, #tpu.memory_space<vmem>>, vector<1x128xf32>
    %5 = vector.broadcast %4 : vector<1x128xf32> to vector<16x128xf32>
    %6 = arith.addf %3, %5 : vector<16x128xf32>
    %c0_5 = arith.constant 0 : index
    %c0_6 = arith.constant 0 : index
    %7 = vector.load %arg4[%c0_5, %c0_6] : memref<16x128xf32, #tpu.memory_space<vmem>>, vector<16x128xf32>
    tpu.vector_store %arg4[%c0_5, %c0_6], %6 {strides = array<i32>} : memref<16x128xf32, #tpu.memory_space<vmem>>, vector<16x128xf32>,
    return
  }
  func.func @transform_0(%arg0: i32) -> (i32, i32) {
    %c0_i32 = arith.constant 0 : i32
    %c0_i32_0 = arith.constant 0 : i32
    return %arg0, %c0_i32 : i32, i32
  }
  func.func @transform_1(%arg0: i32) -> (i32, i32) {
    %c0_i32 = arith.constant 0 : i32
    %c0_i32_0 = arith.constant 0 : i32
    %c0_i32_1 = arith.constant 0 : i32
    return %c0_i32, %c0_i32_0 : i32, i32
  }
  func.func @transform_2(%arg0: i32) -> (i32, i32) {
    %c0_i32 = arith.constant 0 : i32
    %c0_i32_0 = arith.constant 0 : i32
    %c0_i32_1 = arith.constant 0 : i32
    return %c0_i32, %c0_i32_0 : i32, i32
  }
  func.func @transform_3(%arg0: i32) -> (i32, i32) {
    %c0_i32 = arith.constant 0 : i32
    %c0_i32_0 = arith.constant 0 : i32
    return %arg0, %c0_i32 : i32, i32
  }
}

</mosaic_0001>

<llo_original>
// kernel: mock_decoder.1
$region0: #{mock_decoder.1}
  #allocation0 [shape = 'u32[]', space=smem, size = 0x4, offset = 0x4, fixed_abs, tag = 'smem constant byte address 0x4 - core index']
  #allocation1 [shape = 'u32[72,128]{1,0:T(1,128)}', space=vmem, size = 0x9000, scoped, tag = 'internal scratch']
  %s0 = inlined_call_operand.vmem [shape: f32[16,128], index: 0, kind: input, shape index: {}]
  %s1 = inlined_call_operand.hbm [shape: bf16[128,128], index: 1, kind: input, shape index: {}]
  %s2 = inlined_call_operand.vmem [shape: f32[1,128], index: 2, kind: input, shape index: {}]
  %s3 = inlined_call_operand.vmem [shape: f32[16,128], index: 3, kind: output, shape index: {}]
  %s4 = sld [smem:[#allocation0]]
  $region26: #{mock_decoder.1} parent=0
    _
  %s6 = ssub.s32 1, %s4
  %s7 = scalar_select 0, %s6, %s4
  $region1: #{mock_decoder.1} parent=0
    #allocation2 [shape = 'u8[32768]{0}', space=vmem, size = 0x8000, scoped, tag = 'input window, operand 1, single buffered']
    #allocation3 [shape = 's32[1]{0}', space=sflag, size = 0x4, scoped, tag = 'scoped memory for mock_decoder.1']
    %8 = vsyncpa [#allocation3], 0
    // Predicated region
    $region2: #{mock_decoder.1} parent=1 // pred_check
      _
    $region3: #{mock_decoder.1} parent=1 // pred_check_branch
      %10 = sbr.rel (0) target = $region5
    $region4: #{mock_decoder.1} parent=1 // pred_region
      _
    $region5: #{mock_decoder.1} parent=1 // pred_fallthru
      _
    // Predicated region
    $region6: #{mock_decoder.1} parent=1 // pred_check
      _
    $region7: #{mock_decoder.1} parent=1 // pred_check_branch
      %12 = sbr.rel (0) target = $region9
    $region8: #{mock_decoder.1} parent=1 // pred_region
      %14 = vsyncadd [#allocation3], 0
      %s15 = sshll.u32 %s1, 4
      %s16 = int_to_ptr.hbm [resolvable:$true] %s15
      %s17 = sshll.u32 [#allocation2], 4
      %s18 = int_to_ptr.vmem [resolvable:$true] %s17
      %23 = dma.hbm_to_vmem [thread:$0]  %s16, 1024, %s18, [#allocation3], 64, 64, 4
    $region9: #{mock_decoder.1} parent=1 // pred_fallthru
      _
    // Predicated region
    $region10: #{mock_decoder.1} parent=1 // pred_check
      _
    $region11: #{mock_decoder.1} parent=1 // pred_check_branch
      %25 = sbr.rel (0) target = $region13
    $region12: #{mock_decoder.1} parent=1 // pred_region
      _
    $region13: #{mock_decoder.1} parent=1 // pred_fallthru
      _
    // Predicated region
    $region14: #{mock_decoder.1} parent=1 // pred_check
      _
    $region15: #{mock_decoder.1} parent=1 // pred_check_branch
      %27 = sbr.rel (0) target = $region17
    $region16: #{mock_decoder.1} parent=1 // pred_region
      %29 = dma.done [#allocation3], 1024
    $region17: #{mock_decoder.1} parent=1 // pred_fallthru
      _
    %v30 = vld [vmem:[%s0] sm:$0xff]
    %v31 = vld [vmem:[%s0 + $0x8] sm:$0xff]
    %v32 = vpack.c.bf16 %v31, %v30
    %v33 = vld [vmem:[#allocation2] sm:$0xf]
    %v34 = vld [vmem:[#allocation2 + $0x4] sm:$0xf]
    %v35 = vld [vmem:[#allocation2 + $0x8] sm:$0xf]
    %v36 = vld [vmem:[#allocation2 + $0xc] sm:$0xf]
    %v37 = vld [vmem:[#allocation2 + $0x10] sm:$0xf]
    %v38 = vld [vmem:[#allocation2 + $0x14] sm:$0xf]
    %v39 = vld [vmem:[#allocation2 + $0x18] sm:$0xf]
    %v40 = vld [vmem:[#allocation2 + $0x1c] sm:$0xf]
    %v41 = vld [vmem:[#allocation2 + $0x20] sm:$0xf]
    %v42 = vld [vmem:[#allocation2 + $0x24] sm:$0xf]
    %v43 = vld [vmem:[#allocation2 + $0x28] sm:$0xf]
    %v44 = vld [vmem:[#allocation2 + $0x2c] sm:$0xf]
    %v45 = vld [vmem:[#allocation2 + $0x30] sm:$0xf]
    %v46 = vld [vmem:[#allocation2 + $0x34] sm:$0xf]
    %v47 = vld [vmem:[#allocation2 + $0x38] sm:$0xf]
    %v48 = vld [vmem:[#allocation2 + $0x3c] sm:$0xf]
    %v49 = vld [vmem:[%s2] sm:$0x1]
    %v51 = vperm.slane %v49, 0
    %v69 = vunpack.c.l.b16 %v33
    %v70 = vunpack.c.l.b16 %v34
    %v71 = vunpack.c.l.b16 %v35
    %v72 = vunpack.c.l.b16 %v36
    %v73 = vunpack.c.l.b16 %v37
    %v74 = vunpack.c.l.b16 %v38
    %v75 = vunpack.c.l.b16 %v39
    %v76 = vunpack.c.l.b16 %v40
    %v77 = vunpack.c.l.b16 %v41
    %v78 = vunpack.c.l.b16 %v42
    %v79 = vunpack.c.l.b16 %v43
    %v80 = vunpack.c.l.b16 %v44
    %v81 = vunpack.c.l.b16 %v45
    %v82 = vunpack.c.l.b16 %v46
    %v83 = vunpack.c.l.b16 %v47
    %v84 = vunpack.c.l.b16 %v48
    %v85 = vpack.c.b16 %v70, %v69
    %v86 = vpack.c.b16 %v72, %v71
    %v87 = vpack.c.b16 %v74, %v73
    %v88 = vpack.c.b16 %v76, %v75
    %v89 = vpack.c.b16 %v78, %v77
    %v90 = vpack.c.b16 %v80, %v79
    %v91 = vpack.c.b16 %v82, %v81
    %v92 = vpack.c.b16 %v84, %v83
    %101 = vmatpush.bf16.msra.mxu0 %v92
    %102 = vmatpush.bf16.msra.mxu0 %v91
    %103 = vmatpush.bf16.msra.mxu0 %v90
    %104 = vmatpush.bf16.msra.mxu0 %v89
    %105 = vmatpush.bf16.msra.mxu0 %v88
    %106 = vmatpush.bf16.msra.mxu0 %v87
    %107 = vmatpush.bf16.msra.mxu0 %v86
    %108 = vmatpush.bf16.msra.mxu0 %v85
    %109 = vmatmul.bf16.gmra.mxu0 %v32
    %v110 = vpop.f32.mrf.mxu0
    %v111 = vadd.f32 %v51, %v110
    %v112 = vpop.f32.mrf.mxu0
    %v113 = vadd.f32 %v51, %v112
    %114 = vdwg.mxu0
    %115 = vst [vmem:[%s3] sm:$0xff] %v111
    %116 = vst [vmem:[%s3 + $0x8] sm:$0xff] %v113
    // Predicated region
    $region18: #{mock_decoder.1} parent=1 // pred_check
      _
    $region19: #{mock_decoder.1} parent=1 // pred_check_branch
      %118 = sbr.rel (0) target = $region21
    $region20: #{mock_decoder.1} parent=1 // pred_region
      _
    $region21: #{mock_decoder.1} parent=1 // pred_fallthru
      _
    // Predicated region
    $region22: #{mock_decoder.1} parent=1 // pred_check
      _
    $region23: #{mock_decoder.1} parent=1 // pred_check_branch
      %120 = sbr.rel (0) target = $region25
    $region24: #{mock_decoder.1} parent=1 // pred_region
      _
    $region25: #{mock_decoder.1} parent=1 // pred_fallthru
      _
    %121 = vsyncpa [#allocation3], 1

</llo_original>
